<compile_context>
chip_gen: v7x
topology: tpu7x:2x2x1
jax: 0.10.0
libtpu: 0.0.40
codegen_flags: <defaults>
</compile_context>

<pallas_src>
import math
import numpy as np
import jax
import jax.numpy as jnp
from jax import lax
from jax.experimental import pallas as pl
from jax.experimental.pallas import tpu as pltpu

# ----------------------------- configuration --------------------------------
B, N, D = 2, 8, 4                 # batch, set size, in_dim
HIDDEN_DIMS = [32, 32]            # hidden_dims of the module
HH = HIDDEN_DIMS[0]               # MADE / MLP hidden width
H = HIDDEN_DIMS[-1]               # attention feature width
N_HEADS = 2
HD = H // N_HEADS                 # per-head dim
OUT_DIM = 8                       # out_dim (multiple of in_dim)
P = OUT_DIM // D                  # proj output per input dim

BN = B * N                        # 16 rows (b, n)
QW = D * H                        # 128 fused q width (d-major)
GROUPS = D * N_HEADS              # 8 softmax groups per row
GSIZE = BN                        # 16 columns per group: (b', j) for all batches
NCOLS = GROUPS * GSIZE            # 128 score columns (d, head, b', j)
VP = N_HEADS * P                  # 4 folded (head, proj) columns of vproj


# ------------------------------- the kernel ---------------------------------
def zero_trace_attn_kernel(x_ref, xtw_ref,
                           w1qv_ref, b1qv_ref, w2q_ref, b2q_ref, w2v_ref, b2v_ref,
                           w1kt_ref, b1kt_ref, w2kt_ref, b2kt_ref,
                           kmask_ref, vmask_ref, bias_ref, g_ref, gt_ref, bout_ref,
                           o_ref):
    f32, bf16 = jnp.float32, jnp.bfloat16

    # ---- q / v nets, normal orientation: rows = (b, n) ----------------------
    x_bf = x_ref[...].astype(bf16)                                        # (BN, D)
    h_qv = jnp.dot(x_bf, w1qv_ref[...], preferred_element_type=f32) + b1qv_ref[...]
    hq = jnp.maximum(h_qv[:, :HH], 0.0).astype(bf16)                      # MADE: ReLU
    hv = jnp.tanh(h_qv[:, HH:]).astype(bf16)                              # MLP : Tanh

    # q_flat[(b,n), d*H + head*HD + c], 1/sqrt(HD) pre-folded into w2q
    q_flat = (jnp.dot(hq, w2q_ref[...], preferred_element_type=f32)
              + b2q_ref[...]).astype(bf16)                                # (BN, D*H)
    # vproj[(b,n), head*P + p] = sum_c v[.., head*HD+c] * wp[head*HD+c, p]
    vproj = jnp.dot(hv, w2v_ref[...], preferred_element_type=f32) + b2v_ref[...]  # (BN, VP)

    # ---- k net, transposed + lane-replicated: cols = (d, head, b', j) -------
    xtw_bf = xtw_ref[...].astype(bf16)                                    # (D, NCOLS)
    h_kt = jnp.tanh(jnp.dot(w1kt_ref[...], xtw_bf, preferred_element_type=f32)
                    + b1kt_ref[...]).astype(bf16)                         # (HH, NCOLS)
    k_wide = (jnp.dot(w2kt_ref[...], h_kt, preferred_element_type=f32)
              + b2kt_ref[...]).astype(bf16)                               # (H, NCOLS)
    # block-diagonal K over (d, head): sublane-replicate x D, zero off-diagonal
    k_big = jnp.concatenate([k_wide] * D, axis=0) * kmask_ref[...]        # (D*H, NCOLS)

    # block-diagonal V' (wp folded): rows (d, head, b'*N+j), cols (d, p)
    vstack = jnp.concatenate([vproj[:, h * P:(h + 1) * P] for h in range(N_HEADS)],
                             axis=0).astype(bf16)                         # (NH*BN, P)
    v_rep = jnp.concatenate([vstack] * D, axis=0)                         # (NCOLS, P)
    v_big = jnp.concatenate([v_rep] * D, axis=1) * vmask_ref[...]         # (NCOLS, D*P)

    # ---- scores + grouped softmax (one GSIZE-column group per (d, head)) ----
    s = jnp.dot(q_flat, k_big, preferred_element_type=f32) + bias_ref[...]  # (BN, NCOLS)
    e = jnp.exp(s - jnp.max(s, axis=-1, keepdims=True))                   # masked -> 0
    denom = jnp.dot(e.astype(bf16), g_ref[...], preferred_element_type=f32)  # (BN, GROUPS)
    rec = pl.reciprocal(denom, approx=True).astype(bf16)
    rec_b = jnp.dot(rec, gt_ref[...], preferred_element_type=f32)         # (BN, NCOLS)
    p_attn = (e * rec_b).astype(bf16)

    # ---- PV (+ already-folded output projection), direct (B*N, D*P) store ---
    out = jnp.dot(p_attn, v_big, preferred_element_type=f32) + bout_ref[...]
    o_ref[...] = out.astype(o_ref.dtype)


# ------------------------------ parameters ----------------------------------
def make_params(key):
    """Deterministic synthetic parameters matching the module's shapes."""
    ks = jax.random.split(key, 10)

    def lin(k, fan_in, shape):
        return jax.random.normal(k, shape, jnp.float32) / math.sqrt(fan_in)

    # MADE masks (natural ordering, deterministic hidden degrees in [0, D-2]).
    m_in = jnp.arange(D)
    m_hid = jnp.arange(HH) % (D - 1)
    mask1 = (m_in[:, None] <= m_hid[None, :]).astype(jnp.float32)        # (D, HH)
    mask2 = (m_hid[:, None] < m_in[None, :]).astype(jnp.float32)         # (HH, D)
    mask2 = jnp.repeat(mask2[:, :, None], H, axis=2).reshape(HH, D * H)  # (HH, D*H)

    wq1 = lin(ks[0], D, (D, HH)) * mask1
    bq1 = 0.1 * jax.random.normal(ks[1], (1, HH), jnp.float32)
    wq2 = lin(ks[2], HH, (HH, D * H)) * mask2
    bq2 = 0.1 * jax.random.normal(ks[3], (1, D * H), jnp.float32)

    wk1 = lin(ks[4], D, (D, HH))
    bk1 = 0.1 * jax.random.normal(ks[5], (1, HH), jnp.float32)
    wk2 = lin(ks[6], HH, (HH, H))
    bk2 = jnp.zeros((1, H), jnp.float32)          # stribor MLP zeros the final bias

    wv1 = lin(ks[7], D, (D, HH))
    bv1 = 0.1 * jax.random.normal(ks[8], (1, HH), jnp.float32)
    wv2 = lin(ks[9], HH, (HH, H))
    bv2 = jnp.zeros((1, H), jnp.float32)

    wp = lin(jax.random.fold_in(key, 99), H, (H, P))
    bp = jnp.zeros((1, P), jnp.float32)

    return (wq1, bq1, wq2, bq2, wk1, bk1, wk2, bk2, wv1, bv1, wv2, bv2, wp, bp)


def pack_inputs(params):
    """One-time host-side packing: fuse q/v layer-1, fold scale into q weights,
    fold wp into v weights (per head), transpose k weights, precompute the
    block-diagonal masks, softmax bias and group-sum matrices (all bf16/f32)."""
    (wq1, bq1, wq2, bq2, wk1, bk1, wk2, bk2, wv1, bv1, wv2, bv2, wp, bp) = params
    scale = 1.0 / math.sqrt(HD)
    bf16, f32 = jnp.bfloat16, jnp.float32

    w1qv = jnp.concatenate([wq1, wv1], axis=1).astype(bf16)              # (D, 2*HH)
    b1qv = jnp.concatenate([bq1, bv1], axis=1).astype(f32)               # (1, 2*HH)

    w2q = (wq2 * scale).astype(bf16)                                     # (HH, D*H)
    b2q = (bq2 * scale).astype(f32)                                      # (1, D*H)

    wp_bd = jnp.zeros((H, VP), f32)                                      # per-head wp
    for h in range(N_HEADS):
        wp_bd = wp_bd.at[h * HD:(h + 1) * HD, h * P:(h + 1) * P].set(wp[h * HD:(h + 1) * HD, :])
    w2v = (wv2 @ wp_bd).astype(bf16)                                     # (HH, VP)
    b2v = (bv2 @ wp_bd).astype(f32)                                      # (1, VP)

    w1kt = wk1.T.astype(bf16)                                            # (HH, D)
    b1kt = bk1.T.astype(f32)                                             # (HH, 1)
    w2kt = wk2.T.astype(bf16)                                            # (H, HH)
    b2kt = bk2.T.astype(f32)                                             # (H, 1)

    # constant masks / group matrices / softmax bias
    rrow = np.arange(QW)
    ccol = np.arange(NCOLS)
    rgrp = (rrow // H) * N_HEADS + (rrow % H) // HD                      # (d_r, h_r)
    cgrp = ccol // GSIZE                                                 # (d_c, h_c)
    kmask = (rgrp[:, None] == cgrp[None, :]).astype(np.float32)          # (QW, NCOLS)
    vmask = (ccol[:, None] // (N_HEADS * GSIZE)
             == np.arange(D * P)[None, :] // P).astype(np.float32)       # (NCOLS, D*P)
    gmat = (cgrp[:, None] == np.arange(GROUPS)[None, :]).astype(np.float32)  # (NCOLS, GROUPS)

    rows = np.arange(BN)
    bnp = ccol % GSIZE
    keep = ((bnp[None, :] // N == rows[:, None] // N)                    # same batch
            & (bnp[None, :] % N != rows[:, None] % N))                   # off-diagonal
    bias_sm = np.where(keep, 0.0, -1e30).astype(np.float32)              # (BN, NCOLS)

    b_out = jnp.tile(bp, (1, D)).astype(f32)                             # (1, D*P)

    return (w1qv, b1qv, w2q, b2q, w2v, b2v, w1kt, b1kt, w2kt, b2kt,
            jnp.asarray(kmask, bf16), jnp.asarray(vmask, bf16),
            jnp.asarray(bias_sm, f32),
            jnp.asarray(gmat, bf16), jnp.asarray(gmat.T, bf16),
            b_out)


# -------------------------------- wrapper ------------------------------------
def diffeq_zero_trace_attention(t, x, packed):
    """Returns (y, log_det_jac) like the PyTorch forward (t unused: diffeqmlps=False)."""
    del t
    x2 = x.reshape(BN, D)
    xtw = jnp.tile(x2.T, (1, GROUPS))            # (D, NCOLS): column c -> position c % BN

    def full_spec(shape):
        zeros = (0,) * len(shape)
        return pl.BlockSpec(shape, lambda i, _z=zeros: _z)

    operands = (x2, xtw) + tuple(packed)
    in_specs = [full_spec(o.shape) for o in operands]

    y2 = pl.pallas_call(
        zero_trace_attn_kernel,
        out_shape=jax.ShapeDtypeStruct((BN, D * P), x.dtype),
        grid=(1,),
        in_specs=in_specs,
        out_specs=full_spec((BN, D * P)),
        compiler_params=pltpu.CompilerParams(dimension_semantics=("arbitrary",)),
    )(*operands)

    y = y2.reshape(B, N, D * P)                  # contiguous, metadata only
    return y, jnp.zeros_like(x)


# ------------------------- pure-JAX reference (check) ------------------------
def reference(x, params):
    (wq1, bq1, wq2, bq2, wk1, bk1, wk2, bk2, wv1, bv1, wv2, bv2, wp, bp) = params
    hq = jax.nn.relu(x @ wq1 + bq1)
    q = (hq @ wq2 + bq2).reshape(B, N, D, H)
    k = jnp.tanh(x @ wk1 + bk1) @ wk2 + bk2
    v = jnp.tanh(x @ wv1 + bv1) @ wv2 + bv2
    qh = q.reshape(B, N, D, N_HEADS, HD).transpose(0, 2, 3, 1, 4)
    kh = jnp.broadcast_to(k.reshape(B, 1, N, N_HEADS, HD).transpose(0, 1, 3, 2, 4),
                          (B, D, N_HEADS, N, HD))
    vh = jnp.broadcast_to(v.reshape(B, 1, N, N_HEADS, HD).transpose(0, 1, 3, 2, 4),
                          (B, D, N_HEADS, N, HD))
    att = jnp.einsum('bdhqe,bdhke->bdhqk', qh, kh) / math.sqrt(HD)
    att = jnp.where(jnp.eye(N, dtype=bool), -jnp.inf, att)
    p = jax.nn.softmax(att, axis=-1)
    out = jnp.einsum('bdhqk,bdhke->bdhqe', p, vh)
    out = out.transpose(0, 3, 1, 2, 4).reshape(B, N, D, H)
    y = out @ wp + bp
    return y.reshape(B, N, D * P)


# --------------------------------- main --------------------------------------
if __name__ == "__main__":
    key = jax.random.PRNGKey(0)
    kx, kp = jax.random.split(key)
    x = jax.random.normal(kx, (B, N, D), jnp.float32)
    t = jnp.zeros((B, N, 1), jnp.float32)
    params = make_params(kp)

    packed = pack_inputs(params)          # hoisted: packed ONCE, outside the forward path
    forward = jax.jit(diffeq_zero_trace_attention)

    y, ldj = forward(t, x, packed)
    y = jax.block_until_ready(y)
    ldj = jax.block_until_ready(ldj)

    y_ref = reference(x, params)
    assert y.shape == (B, N, OUT_DIM), y.shape
    assert ldj.shape == x.shape and float(jnp.abs(ldj).max()) == 0.0
    assert jnp.allclose(y, y_ref, atol=2e-2, rtol=2e-2), \
        f"max err {float(jnp.abs(y - y_ref).max())}"

    print("KERNEL_OK")
</pallas_src>

<mosaic_0001>
module attributes {stable_mosaic.version = 11 : i64} {
  func.func @zero_trace_attn_kernel(%arg0: i32, %arg1: memref<16x4xf32, #tpu.memory_space<vmem>>, %arg2: memref<4x128xf32, #tpu.memory_space<vmem>>, %arg3: memref<4x64xbf16, #tpu.memory_space<vmem>>, %arg4: memref<1x64xf32, #tpu.memory_space<vmem>>, %arg5: memref<32x128xbf16, #tpu.memory_space<vmem>>, %arg6: memref<1x128xf32, #tpu.memory_space<vmem>>, %arg7: memref<32x4xbf16, #tpu.memory_space<vmem>>, %arg8: memref<1x4xf32, #tpu.memory_space<vmem>>, %arg9: memref<32x4xbf16, #tpu.memory_space<vmem>>, %arg10: memref<32x1xf32, #tpu.memory_space<vmem>>, %arg11: memref<32x32xbf16, #tpu.memory_space<vmem>>, %arg12: memref<32x1xf32, #tpu.memory_space<vmem>>, %arg13: memref<128x128xbf16, #tpu.memory_space<vmem>>, %arg14: memref<128x8xbf16, #tpu.memory_space<vmem>>, %arg15: memref<16x128xf32, #tpu.memory_space<vmem>>, %arg16: memref<128x8xbf16, #tpu.memory_space<vmem>>, %arg17: memref<8x128xbf16, #tpu.memory_space<vmem>>, %arg18: memref<1x8xf32, #tpu.memory_space<vmem>>, %arg19: memref<16x8xf32, #tpu.memory_space<vmem>>) attributes {dimension_semantics = [#tpu.dimension_semantics<arbitrary>], iteration_bounds = array<i64: 1>, scalar_prefetch = 0 : i64, scratch_operands = 0 : i64, tpu.core_type = #tpu.core_type<tc>, window_params = [{pipeline_mode = #tpu.pipeline_mode<synchronous>, transform_indices = @transform_0, window_bounds = array<i64: 16, 4>}, {pipeline_mode = #tpu.pipeline_mode<synchronous>, transform_indices = @transform_1, window_bounds = array<i64: 4, 128>}, {pipeline_mode = #tpu.pipeline_mode<synchronous>, transform_indices = @transform_2, window_bounds = array<i64: 4, 64>}, {pipeline_mode = #tpu.pipeline_mode<synchronous>, transform_indices = @transform_3, window_bounds = array<i64: 1, 64>}, {pipeline_mode = #tpu.pipeline_mode<synchronous>, transform_indices = @transform_4, window_bounds = array<i64: 32, 128>}, {pipeline_mode = #tpu.pipeline_mode<synchronous>, transform_indices = @transform_5, window_bounds = array<i64: 1, 128>}, {pipeline_mode = #tpu.pipeline_mode<synchronous>, transform_indices = @transform_6, window_bounds = array<i64: 32, 4>}, {pipeline_mode = #tpu.pipeline_mode<synchronous>, transform_indices = @transform_7, window_bounds = array<i64: 1, 4>}, {pipeline_mode = #tpu.pipeline_mode<synchronous>, transform_indices = @transform_8, window_bounds = array<i64: 32, 4>}, {pipeline_mode = #tpu.pipeline_mode<synchronous>, transform_indices = @transform_9, window_bounds = array<i64: 32, 1>}, {pipeline_mode = #tpu.pipeline_mode<synchronous>, transform_indices = @transform_10, window_bounds = array<i64: 32, 32>}, {pipeline_mode = #tpu.pipeline_mode<synchronous>, transform_indices = @transform_11, window_bounds = array<i64: 32, 1>}, {pipeline_mode = #tpu.pipeline_mode<synchronous>, transform_indices = @transform_12, window_bounds = array<i64: 128, 128>}, {pipeline_mode = #tpu.pipeline_mode<synchronous>, transform_indices = @transform_13, window_bounds = array<i64: 128, 8>}, {pipeline_mode = #tpu.pipeline_mode<synchronous>, transform_indices = @transform_14, window_bounds = array<i64: 16, 128>}, {pipeline_mode = #tpu.pipeline_mode<synchronous>, transform_indices = @transform_15, window_bounds = array<i64: 128, 8>}, {pipeline_mode = #tpu.pipeline_mode<synchronous>, transform_indices = @transform_16, window_bounds = array<i64: 8, 128>}, {pipeline_mode = #tpu.pipeline_mode<synchronous>, transform_indices = @transform_17, window_bounds = array<i64: 1, 8>}, {pipeline_mode = #tpu.pipeline_mode<synchronous>, transform_indices = @transform_18, window_bounds = array<i64: 16, 8>}]} {
    %c0 = arith.constant 0 : index
    %c0_0 = arith.constant 0 : index
    %0 = vector.load %arg1[%c0, %c0_0] : memref<16x4xf32, #tpu.memory_space<vmem>>, vector<16x4xf32>
    %1 = arith.truncf %0 : vector<16x4xf32> to vector<16x4xbf16>
    %c0_1 = arith.constant 0 : index
    %c0_2 = arith.constant 0 : index
    %2 = vector.load %arg3[%c0_1, %c0_2] : memref<4x64xbf16, #tpu.memory_space<vmem>>, vector<4x64xbf16>
    %cst = arith.constant dense<0.000000e+00> : vector<16x64xf32>
    %3 = tpu.matmul %1, %2, %cst {dimension_numbers = #tpu.dot_dimension_numbers<[1], [0], [0], [1], [0, 0, 1, 1], [], []>} : vector<16x4xbf16>, vector<4x64xbf16>, vector<16x64xf32> -> vector<16x64xf32>
    %c0_3 = arith.constant 0 : index
    %c0_4 = arith.constant 0 : index
    %4 = vector.load %arg4[%c0_3, %c0_4] : memref<1x64xf32, #tpu.memory_space<vmem>>, vector<1x64xf32>
    %5 = vector.broadcast %4 : vector<1x64xf32> to vector<16x64xf32>
    %6 = arith.addf %3, %5 : vector<16x64xf32>
    %7 = vector.extract_strided_slice %6 {offsets = [0, 0], sizes = [16, 32], strides = [1, 1]} : vector<16x64xf32> to vector<16x32xf32>
    %cst_5 = arith.constant 0.000000e+00 : f32
    %8 = vector.broadcast %cst_5 : f32 to vector<16x32xf32>
    %9 = arith.maximumf %7, %8 : vector<16x32xf32>
    %10 = arith.truncf %9 : vector<16x32xf32> to vector<16x32xbf16>
    %11 = vector.extract_strided_slice %6 {offsets = [0, 32], sizes = [16, 32], strides = [1, 1]} : vector<16x64xf32> to vector<16x32xf32>
    %12 = math.tanh %11 : vector<16x32xf32>
    %13 = arith.truncf %12 : vector<16x32xf32> to vector<16x32xbf16>
    %c0_6 = arith.constant 0 : index
    %c0_7 = arith.constant 0 : index
    %14 = vector.load %arg5[%c0_6, %c0_7] : memref<32x128xbf16, #tpu.memory_space<vmem>>, vector<32x128xbf16>
    %cst_8 = arith.constant dense<0.000000e+00> : vector<16x128xf32>
    %15 = tpu.matmul %10, %14, %cst_8 {dimension_numbers = #tpu.dot_dimension_numbers<[1], [0], [0], [1], [0, 0, 1, 1], [], []>} : vector<16x32xbf16>, vector<32x128xbf16>, vector<16x128xf32> -> vector<16x128xf32>
    %c0_9 = arith.constant 0 : index
    %c0_10 = arith.constant 0 : index
    %16 = vector.load %arg6[%c0_9, %c0_10] : memref<1x128xf32, #tpu.memory_space<vmem>>, vector<1x128xf32>
    %17 = vector.broadcast %16 : vector<1x128xf32> to vector<16x128xf32>
    %18 = arith.addf %15, %17 : vector<16x128xf32>
    %19 = arith.truncf %18 : vector<16x128xf32> to vector<16x128xbf16>
    %c0_11 = arith.constant 0 : index
    %c0_12 = arith.constant 0 : index
    %20 = vector.load %arg7[%c0_11, %c0_12] : memref<32x4xbf16, #tpu.memory_space<vmem>>, vector<32x4xbf16>
    %cst_13 = arith.constant dense<0.000000e+00> : vector<16x4xf32>
    %21 = tpu.matmul %13, %20, %cst_13 {dimension_numbers = #tpu.dot_dimension_numbers<[1], [0], [0], [1], [0, 0, 1, 1], [], []>} : vector<16x32xbf16>, vector<32x4xbf16>, vector<16x4xf32> -> vector<16x4xf32>
    %c0_14 = arith.constant 0 : index
    %c0_15 = arith.constant 0 : index
    %22 = vector.load %arg8[%c0_14, %c0_15] : memref<1x4xf32, #tpu.memory_space<vmem>>, vector<1x4xf32>
    %23 = vector.broadcast %22 : vector<1x4xf32> to vector<16x4xf32>
    %24 = arith.addf %21, %23 : vector<16x4xf32>
    %c0_16 = arith.constant 0 : index
    %c0_17 = arith.constant 0 : index
    %25 = vector.load %arg2[%c0_16, %c0_17] : memref<4x128xf32, #tpu.memory_space<vmem>>, vector<4x128xf32>
    %26 = arith.truncf %25 : vector<4x128xf32> to vector<4x128xbf16>
    %c0_18 = arith.constant 0 : index
    %c0_19 = arith.constant 0 : index
    %27 = vector.load %arg9[%c0_18, %c0_19] : memref<32x4xbf16, #tpu.memory_space<vmem>>, vector<32x4xbf16>
    %cst_20 = arith.constant dense<0.000000e+00> : vector<32x128xf32>
    %28 = tpu.matmul %27, %26, %cst_20 {dimension_numbers = #tpu.dot_dimension_numbers<[1], [0], [0], [1], [0, 0, 1, 1], [], []>} : vector<32x4xbf16>, vector<4x128xbf16>, vector<32x128xf32> -> vector<32x128xf32>
    %c0_21 = arith.constant 0 : index
    %c0_22 = arith.constant 0 : index
    %29 = vector.load %arg10[%c0_21, %c0_22] : memref<32x1xf32, #tpu.memory_space<vmem>>, vector<32x1xf32>
    %30 = vector.broadcast %29 : vector<32x1xf32> to vector<32x128xf32>
    %31 = arith.addf %28, %30 : vector<32x128xf32>
    %32 = math.tanh %31 : vector<32x128xf32>
    %33 = arith.truncf %32 : vector<32x128xf32> to vector<32x128xbf16>
    %c0_23 = arith.constant 0 : index
    %c0_24 = arith.constant 0 : index
    %34 = vector.load %arg11[%c0_23, %c0_24] : memref<32x32xbf16, #tpu.memory_space<vmem>>, vector<32x32xbf16>
    %cst_25 = arith.constant dense<0.000000e+00> : vector<32x128xf32>
    %35 = tpu.matmul %34, %33, %cst_25 {dimension_numbers = #tpu.dot_dimension_numbers<[1], [0], [0], [1], [0, 0, 1, 1], [], []>} : vector<32x32xbf16>, vector<32x128xbf16>, vector<32x128xf32> -> vector<32x128xf32>
    %c0_26 = arith.constant 0 : index
    %c0_27 = arith.constant 0 : index
    %36 = vector.load %arg12[%c0_26, %c0_27] : memref<32x1xf32, #tpu.memory_space<vmem>>, vector<32x1xf32>
    %37 = vector.broadcast %36 : vector<32x1xf32> to vector<32x128xf32>
    %38 = arith.addf %35, %37 : vector<32x128xf32>
    %39 = arith.truncf %38 : vector<32x128xf32> to vector<32x128xbf16>
    %40 = tpu.concatenate %39, %39, %39, %39 in 0 : vector<32x128xbf16>, vector<32x128xbf16>, vector<32x128xbf16>, vector<32x128xbf16> -> vector<128x128xbf16>
    %c0_28 = arith.constant 0 : index
    %c0_29 = arith.constant 0 : index
    %41 = vector.load %arg13[%c0_28, %c0_29] : memref<128x128xbf16, #tpu.memory_space<vmem>>, vector<128x128xbf16>
    %42 = arith.mulf %40, %41 : vector<128x128xbf16>
    %43 = vector.extract_strided_slice %24 {offsets = [0, 0], sizes = [16, 2], strides = [1, 1]} : vector<16x4xf32> to vector<16x2xf32>
    %44 = vector.extract_strided_slice %24 {offsets = [0, 2], sizes = [16, 2], strides = [1, 1]} : vector<16x4xf32> to vector<16x2xf32>
    %45 = tpu.concatenate %43, %44 in 0 : vector<16x2xf32>, vector<16x2xf32> -> vector<32x2xf32>
    %46 = arith.truncf %45 : vector<32x2xf32> to vector<32x2xbf16>
    %47 = tpu.concatenate %46, %46, %46, %46 in 0 : vector<32x2xbf16>, vector<32x2xbf16>, vector<32x2xbf16>, vector<32x2xbf16> -> vector<128x2xbf16>
    %48 = tpu.concatenate %47, %47, %47, %47 in 1 : vector<128x2xbf16>, vector<128x2xbf16>, vector<128x2xbf16>, vector<128x2xbf16> -> vector<128x8xbf16>
    %c0_30 = arith.constant 0 : index
    %c0_31 = arith.constant 0 : index
    %49 = vector.load %arg14[%c0_30, %c0_31] : memref<128x8xbf16, #tpu.memory_space<vmem>>, vector<128x8xbf16>
    %50 = arith.mulf %48, %49 : vector<128x8xbf16>
    %cst_32 = arith.constant dense<0.000000e+00> : vector<16x128xf32>
    %51 = tpu.matmul %19, %42, %cst_32 {dimension_numbers = #tpu.dot_dimension_numbers<[1], [0], [0], [1], [0, 0, 1, 1], [], []>} : vector<16x128xbf16>, vector<128x128xbf16>, vector<16x128xf32> -> vector<16x128xf32>
    %c0_33 = arith.constant 0 : index
    %c0_34 = arith.constant 0 : index
    %52 = vector.load %arg15[%c0_33, %c0_34] : memref<16x128xf32, #tpu.memory_space<vmem>>, vector<16x128xf32>
    %53 = arith.addf %51, %52 : vector<16x128xf32>
    %cst_35 = arith.constant dense<0xFF800000> : vector<16xf32>
    %54 = vector.multi_reduction <maximumf>, %53, %cst_35 [1] : vector<16x128xf32> to vector<16xf32>
    %55 = vector.shape_cast %54 : vector<16xf32> to vector<16x1xf32>
    %56 = vector.broadcast %55 : vector<16x1xf32> to vector<16x128xf32>
    %57 = arith.subf %53, %56 : vector<16x128xf32>
    %58 = math.exp %57 : vector<16x128xf32>
    %59 = arith.truncf %58 : vector<16x128xf32> to vector<16x128xbf16>
    %c0_36 = arith.constant 0 : index
    %c0_37 = arith.constant 0 : index
    %60 = vector.load %arg16[%c0_36, %c0_37] : memref<128x8xbf16, #tpu.memory_space<vmem>>, vector<128x8xbf16>
    %cst_38 = arith.constant dense<0.000000e+00> : vector<16x8xf32>
    %61 = tpu.matmul %59, %60, %cst_38 {dimension_numbers = #tpu.dot_dimension_numbers<[1], [0], [0], [1], [0, 0, 1, 1], [], []>} : vector<16x128xbf16>, vector<128x8xbf16>, vector<16x8xf32> -> vector<16x8xf32>
    %62 = tpu.reciprocal %61 {approx = true} : vector<16x8xf32> -> vector<16x8xf32>
    %63 = arith.truncf %62 : vector<16x8xf32> to vector<16x8xbf16>
    %c0_39 = arith.constant 0 : index
    %c0_40 = arith.constant 0 : index
    %64 = vector.load %arg17[%c0_39, %c0_40] : memref<8x128xbf16, #tpu.memory_space<vmem>>, vector<8x128xbf16>
    %cst_41 = arith.constant dense<0.000000e+00> : vector<16x128xf32>
    %65 = tpu.matmul %63, %64, %cst_41 {dimension_numbers = #tpu.dot_dimension_numbers<[1], [0], [0], [1], [0, 0, 1, 1], [], []>} : vector<16x8xbf16>, vector<8x128xbf16>, vector<16x128xf32> -> vector<16x128xf32>
    %66 = arith.mulf %58, %65 : vector<16x128xf32>
    %67 = arith.truncf %66 : vector<16x128xf32> to vector<16x128xbf16>
    %cst_42 = arith.constant dense<0.000000e+00> : vector<16x8xf32>
    %68 = tpu.matmul %67, %50, %cst_42 {dimension_numbers = #tpu.dot_dimension_numbers<[1], [0], [0], [1], [0, 0, 1, 1], [], []>} : vector<16x128xbf16>, vector<128x8xbf16>, vector<16x8xf32> -> vector<16x8xf32>
    %c0_43 = arith.constant 0 : index
    %c0_44 = arith.constant 0 : index
    %69 = vector.load %arg18[%c0_43, %c0_44] : memref<1x8xf32, #tpu.memory_space<vmem>>, vector<1x8xf32>
    %70 = vector.broadcast %69 : vector<1x8xf32> to vector<16x8xf32>
    %71 = arith.addf %68, %70 : vector<16x8xf32>
    %c0_45 = arith.constant 0 : index
    %c0_46 = arith.constant 0 : index
    %72 = vector.load %arg19[%c0_45, %c0_46] : memref<16x8xf32, #tpu.memory_space<vmem>>, vector<16x8xf32>
    tpu.vector_store %arg19[%c0_45, %c0_46], %71 {strides = array<i32>} : memref<16x8xf32, #tpu.memory_space<vmem>>, vector<16x8xf32>,
    return
  }
  func.func @transform_0(%arg0: i32) -> (i32, i32) {
    %c0_i32 = arith.constant 0 : i32
    %c0_i32_0 = arith.constant 0 : i32
    %c0_i32_1 = arith.constant 0 : i32
    return %c0_i32, %c0_i32_0 : i32, i32
  }
  func.func @transform_1(%arg0: i32) -> (i32, i32) {
    %c0_i32 = arith.constant 0 : i32
    %c0_i32_0 = arith.constant 0 : i32
    %c0_i32_1 = arith.constant 0 : i32
    return %c0_i32, %c0_i32_0 : i32, i32
  }
  func.func @transform_2(%arg0: i32) -> (i32, i32) {
    %c0_i32 = arith.constant 0 : i32
    %c0_i32_0 = arith.constant 0 : i32
    %c0_i32_1 = arith.constant 0 : i32
    return %c0_i32, %c0_i32_0 : i32, i32
  }
  func.func @transform_3(%arg0: i32) -> (i32, i32) {
    %c0_i32 = arith.constant 0 : i32
    %c0_i32_0 = arith.constant 0 : i32
    %c0_i32_1 = arith.constant 0 : i32
    return %c0_i32, %c0_i32_0 : i32, i32
  }
  func.func @transform_4(%arg0: i32) -> (i32, i32) {
    %c0_i32 = arith.constant 0 : i32
    %c0_i32_0 = arith.constant 0 : i32
    %c0_i32_1 = arith.constant 0 : i32
    return %c0_i32, %c0_i32_0 : i32, i32
  }
  func.func @transform_5(%arg0: i32) -> (i32, i32) {
    %c0_i32 = arith.constant 0 : i32
    %c0_i32_0 = arith.constant 0 : i32
    %c0_i32_1 = arith.constant 0 : i32
    return %c0_i32, %c0_i32_0 : i32, i32
  }
  func.func @transform_6(%arg0: i32) -> (i32, i32) {
    %c0_i32 = arith.constant 0 : i32
    %c0_i32_0 = arith.constant 0 : i32
    %c0_i32_1 = arith.constant 0 : i32
    return %c0_i32, %c0_i32_0 : i32, i32
  }
  func.func @transform_7(%arg0: i32) -> (i32, i32) {
    %c0_i32 = arith.constant 0 : i32
    %c0_i32_0 = arith.constant 0 : i32
    %c0_i32_1 = arith.constant 0 : i32
    return %c0_i32, %c0_i32_0 : i32, i32
  }
  func.func @transform_8(%arg0: i32) -> (i32, i32) {
    %c0_i32 = arith.constant 0 : i32
    %c0_i32_0 = arith.constant 0 : i32
    %c0_i32_1 = arith.constant 0 : i32
    return %c0_i32, %c0_i32_0 : i32, i32
  }
  func.func @transform_9(%arg0: i32) -> (i32, i32) {
    %c0_i32 = arith.constant 0 : i32
    %c0_i32_0 = arith.constant 0 : i32
    %c0_i32_1 = arith.constant 0 : i32
    return %c0_i32, %c0_i32_0 : i32, i32
  }
  func.func @transform_10(%arg0: i32) -> (i32, i32) {
    %c0_i32 = arith.constant 0 : i32
    %c0_i32_0 = arith.constant 0 : i32
    %c0_i32_1 = arith.constant 0 : i32
    return %c0_i32, %c0_i32_0 : i32, i32
  }
  func.func @transform_11(%arg0: i32) -> (i32, i32) {
    %c0_i32 = arith.constant 0 : i32
    %c0_i32_0 = arith.constant 0 : i32
    %c0_i32_1 = arith.constant 0 : i32
    return %c0_i32, %c0_i32_0 : i32, i32
  }
  func.func @transform_12(%arg0: i32) -> (i32, i32) {
    %c0_i32 = arith.constant 0 : i32
    %c0_i32_0 = arith.constant 0 : i32
    %c0_i32_1 = arith.constant 0 : i32
    return %c0_i32, %c0_i32_0 : i32, i32
  }
  func.func @transform_13(%arg0: i32) -> (i32, i32) {
    %c0_i32 = arith.constant 0 : i32
    %c0_i32_0 = arith.constant 0 : i32
    %c0_i32_1 = arith.constant 0 : i32
    return %c0_i32, %c0_i32_0 : i32, i32
  }
  func.func @transform_14(%arg0: i32) -> (i32, i32) {
    %c0_i32 = arith.constant 0 : i32
    %c0_i32_0 = arith.constant 0 : i32
    %c0_i32_1 = arith.constant 0 : i32
    return %c0_i32, %c0_i32_0 : i32, i32
  }
  func.func @transform_15(%arg0: i32) -> (i32, i32) {
    %c0_i32 = arith.constant 0 : i32
    %c0_i32_0 = arith.constant 0 : i32
    %c0_i32_1 = arith.constant 0 : i32
    return %c0_i32, %c0_i32_0 : i32, i32
  }
  func.func @transform_16(%arg0: i32) -> (i32, i32) {
    %c0_i32 = arith.constant 0 : i32
    %c0_i32_0 = arith.constant 0 : i32
    %c0_i32_1 = arith.constant 0 : i32
    return %c0_i32, %c0_i32_0 : i32, i32
  }
  func.func @transform_17(%arg0: i32) -> (i32, i32) {
    %c0_i32 = arith.constant 0 : i32
    %c0_i32_0 = arith.constant 0 : i32
    %c0_i32_1 = arith.constant 0 : i32
    return %c0_i32, %c0_i32_0 : i32, i32
  }
  func.func @transform_18(%arg0: i32) -> (i32, i32) {
    %c0_i32 = arith.constant 0 : i32
    %c0_i32_0 = arith.constant 0 : i32
    %c0_i32_1 = arith.constant 0 : i32
    return %c0_i32, %c0_i32_0 : i32, i32
  }
}

</mosaic_0001>

<llo_original>
// kernel: tile.9
$region0: #{tile.9}
  %s0 = inlined_call_operand.vmem [shape: f32[4,8,16], index: 0, kind: input, shape index: {}]
  %s1 = inlined_call_operand.vmem [shape: f32[4,128], index: 1, kind: output, shape index: {}]
  $region1: #{tile.9} parent=0
    #allocation0 [shape = 'u8[4096]{0}', space=vmem, size = 0x1000, scoped, tag = 'scoped mem for output reshape']
    %v2 = vld [vmem:[%s0] ss:$8 sm:$0xf]
    %vm3 = vcmask 130048
    %4 = vst.msk [vmem:[#allocation0] sm:$0xf] %vm3, %v2
    %s5 = scalar_lea.vmem %s0, 7
    %v6 = vld [vmem:[%s5] ss:$8 sm:$0xf]
    %7 = vrot.lane.b32.xlu0 %v6, 112
    %v8 = vpop.permute.xlu0 %7
    %vm9 = vcmask 1048448
    %10 = vst.msk [vmem:[#allocation0] sm:$0xf] %vm9, %v8
    %s11 = scalar_lea.vmem %s0, 6
    %v12 = vld [vmem:[%s11] ss:$8 sm:$0xf]
    %13 = vrot.lane.b32.xlu0 %v12, 96
    %v14 = vpop.permute.xlu0 %13
    %vm15 = vcmask 917248
    %16 = vst.msk [vmem:[#allocation0] sm:$0xf] %vm15, %v14
    %s17 = scalar_lea.vmem %s0, 5
    %v18 = vld [vmem:[%s17] ss:$8 sm:$0xf]
    %19 = vrot.lane.b32.xlu0 %v18, 80
    %v20 = vpop.permute.xlu0 %19
    %vm21 = vcmask 786048
    %22 = vst.msk [vmem:[#allocation0] sm:$0xf] %vm21, %v20
    %s23 = scalar_lea.vmem %s0, 4
    %v24 = vld [vmem:[%s23] ss:$8 sm:$0xf]
    %25 = vrot.lane.b32.xlu0 %v24, 64
    %v26 = vpop.permute.xlu0 %25
    %vm27 = vcmask 654848
    %28 = vst.msk [vmem:[#allocation0] sm:$0xf] %vm27, %v26
    %s29 = scalar_lea.vmem %s0, 3
    %v30 = vld [vmem:[%s29] ss:$8 sm:$0xf]
    %31 = vrot.lane.b32.xlu0 %v30, 48
    %v32 = vpop.permute.xlu0 %31
    %vm33 = vcmask 523648
    %34 = vst.msk [vmem:[#allocation0] sm:$0xf] %vm33, %v32
    %s35 = scalar_lea.vmem %s0, 2
    %v36 = vld [vmem:[%s35] ss:$8 sm:$0xf]
    %37 = vrot.lane.b32.xlu0 %v36, 32
    %v38 = vpop.permute.xlu0 %37
    %vm39 = vcmask 392448
    %40 = vst.msk [vmem:[#allocation0] sm:$0xf] %vm39, %v38
    %s41 = scalar_lea.vmem %s0, 1
    %v42 = vld [vmem:[%s41] ss:$8 sm:$0xf]
    %43 = vrot.lane.b32.xlu0 %v42, 16
    %v44 = vpop.permute.xlu0 %43
    %vm45 = vcmask 261248
    %46 = vst.msk [vmem:[#allocation0] sm:$0xf] %vm45, %v44
    %s48 = sshllo.u32 0, 4
    %v50 = vld [vmem:[#allocation0] sm:%s48]
    %s51 = sshllo.u32 0, 4
    %52 = vst [vmem:[%s1] sm:%s51] %v50

// kernel: diffeq_zero_trace_attention.1
$region0: #{diffeq_zero_trace_attention.1}
  #allocation0 [shape = 'u32[]', space=smem, size = 0x4, offset = 0x4, fixed_abs, tag = 'smem constant byte address 0x4 - core index']
  #allocation1 [shape = 'u32[144,128]{1,0:T(1,128)}', space=vmem, size = 0x12000, scoped, tag = 'internal scratch']
  %s0 = inlined_call_operand.vmem [shape: f32[16,4], index: 0, kind: input, shape index: {}]
  %s1 = inlined_call_operand.vmem [shape: f32[4,128], index: 1, kind: input, shape index: {}]
  %s2 = inlined_call_operand.vmem [shape: bf16[4,64], index: 2, kind: input, shape index: {}]
  %s3 = inlined_call_operand.vmem [shape: f32[1,64], index: 3, kind: input, shape index: {}]
  %s4 = inlined_call_operand.vmem [shape: bf16[32,128], index: 4, kind: input, shape index: {}]
  %s5 = inlined_call_operand.vmem [shape: f32[1,128], index: 5, kind: input, shape index: {}]
  %s6 = inlined_call_operand.vmem [shape: bf16[32,4], index: 6, kind: input, shape index: {}]
  %s7 = inlined_call_operand.vmem [shape: f32[1,4], index: 7, kind: input, shape index: {}]
  %s8 = inlined_call_operand.vmem [shape: bf16[32,4], index: 8, kind: input, shape index: {}]
  %s9 = inlined_call_operand.vmem [shape: f32[32,1], index: 9, kind: input, shape index: {}]
  %s10 = inlined_call_operand.vmem [shape: bf16[32,32], index: 10, kind: input, shape index: {}]
  %s11 = inlined_call_operand.vmem [shape: f32[32,1], index: 11, kind: input, shape index: {}]
  %s12 = inlined_call_operand.vmem [shape: bf16[128,128], index: 12, kind: input, shape index: {}]
  %s13 = inlined_call_operand.vmem [shape: bf16[128,8], index: 13, kind: input, shape index: {}]
  %s14 = inlined_call_operand.vmem [shape: f32[16,128], index: 14, kind: input, shape index: {}]
  %s15 = inlined_call_operand.vmem [shape: bf16[128,8], index: 15, kind: input, shape index: {}]
  %s16 = inlined_call_operand.vmem [shape: bf16[8,128], index: 16, kind: input, shape index: {}]
  %s17 = inlined_call_operand.vmem [shape: f32[1,8], index: 17, kind: input, shape index: {}]
  %s18 = inlined_call_operand.hbm [shape: f32[16,8], index: 18, kind: output, shape index: {}]
  %s19 = sld [smem:[#allocation0]]
  $region82: #{diffeq_zero_trace_attention.1} parent=0
    _
  %s21 = ssub.s32 1, %s19
  %s22 = scalar_select 0, %s21, %s19
  $region1: #{diffeq_zero_trace_attention.1} parent=0
    #allocation2 [shape = 'u8[8192]{0}', space=vmem, size = 0x2000, scoped, tag = 'output window, operand 0, single buffered']
    #allocation3 [shape = 's32[1]{0}', space=sflag, size = 0x4, scoped, tag = 'scoped memory for diffeq_zero_trace_attention.1']
    %23 = vsyncpa [#allocation3], 0
    // Predicated region
    $region2: #{diffeq_zero_trace_attention.1} parent=1 // pred_check
      _
    $region3: #{diffeq_zero_trace_attention.1} parent=1 // pred_check_branch
      %25 = sbr.rel (0) target = $region5
    $region4: #{diffeq_zero_trace_attention.1} parent=1 // pred_region
      _
    $region5: #{diffeq_zero_trace_attention.1} parent=1 // pred_fallthru
      _
    // Predicated region
    $region6: #{diffeq_zero_trace_attention.1} parent=1 // pred_check
      _
    $region7: #{diffeq_zero_trace_attention.1} parent=1 // pred_check_branch
      %27 = sbr.rel (0) target = $region9
    $region8: #{diffeq_zero_trace_attention.1} parent=1 // pred_region
      _
    $region9: #{diffeq_zero_trace_attention.1} parent=1 // pred_fallthru
      _
    // Predicated region
    $region10: #{diffeq_zero_trace_attention.1} parent=1 // pred_check
      _
    $region11: #{diffeq_zero_trace_attention.1} parent=1 // pred_check_branch
      %29 = sbr.rel (0) target = $region13
    $region12: #{diffeq_zero_trace_attention.1} parent=1 // pred_region
      _
    $region13: #{diffeq_zero_trace_attention.1} parent=1 // pred_fallthru
      _
    // Predicated region
    $region14: #{diffeq_zero_trace_attention.1} parent=1 // pred_check
      _
    $region15: #{diffeq_zero_trace_attention.1} parent=1 // pred_check_branch
      %31 = sbr.rel (0) target = $region17
    $region16: #{diffeq_zero_trace_attention.1} parent=1 // pred_region
      _
    $region17: #{diffeq_zero_trace_attention.1} parent=1 // pred_fallthru
      _
    // Predicated region
    $region18: #{diffeq_zero_trace_attention.1} parent=1 // pred_check
      _
    $region19: #{diffeq_zero_trace_attention.1} parent=1 // pred_check_branch
      %33 = sbr.rel (0) target = $region21
    $region20: #{diffeq_zero_trace_attention.1} parent=1 // pred_region
      _
    $region21: #{diffeq_zero_trace_attention.1} parent=1 // pred_fallthru
      _
    // Predicated region
    $region22: #{diffeq_zero_trace_attention.1} parent=1 // pred_check
      _
    $region23: #{diffeq_zero_trace_attention.1} parent=1 // pred_check_branch
      %35 = sbr.rel (0) target = $region25
    $region24: #{diffeq_zero_trace_attention.1} parent=1 // pred_region
      _
    $region25: #{diffeq_zero_trace_attention.1} parent=1 // pred_fallthru
      _
    // Predicated region
    $region26: #{diffeq_zero_trace_attention.1} parent=1 // pred_check
      _
    $region27: #{diffeq_zero_trace_attention.1} parent=1 // pred_check_branch
      %37 = sbr.rel (0) target = $region29
    $region28: #{diffeq_zero_trace_attention.1} parent=1 // pred_region
      _
    $region29: #{diffeq_zero_trace_attention.1} parent=1 // pred_fallthru
      _
    // Predicated region
    $region30: #{diffeq_zero_trace_attention.1} parent=1 // pred_check
      _
    $region31: #{diffeq_zero_trace_attention.1} parent=1 // pred_check_branch
      %39 = sbr.rel (0) target = $region33
    $region32: #{diffeq_zero_trace_attention.1} parent=1 // pred_region
      _
    $region33: #{diffeq_zero_trace_attention.1} parent=1 // pred_fallthru
      _
    // Predicated region
    $region34: #{diffeq_zero_trace_attention.1} parent=1 // pred_check
      _
    $region35: #{diffeq_zero_trace_attention.1} parent=1 // pred_check_branch
      %41 = sbr.rel (0) target = $region37
    $region36: #{diffeq_zero_trace_attention.1} parent=1 // pred_region
      _
    $region37: #{diffeq_zero_trace_attention.1} parent=1 // pred_fallthru
      _
    // Predicated region
    $region38: #{diffeq_zero_trace_attention.1} parent=1 // pred_check
      _
    $region39: #{diffeq_zero_trace_attention.1} parent=1 // pred_check_branch
      %43 = sbr.rel (0) target = $region41
    $region40: #{diffeq_zero_trace_attention.1} parent=1 // pred_region
      _
    $region41: #{diffeq_zero_trace_attention.1} parent=1 // pred_fallthru
      _
    // Predicated region
    $region42: #{diffeq_zero_trace_attention.1} parent=1 // pred_check
      _
    $region43: #{diffeq_zero_trace_attention.1} parent=1 // pred_check_branch
      %45 = sbr.rel (0) target = $region45
    $region44: #{diffeq_zero_trace_attention.1} parent=1 // pred_region
      _
    $region45: #{diffeq_zero_trace_attention.1} parent=1 // pred_fallthru
      _
    // Predicated region
    $region46: #{diffeq_zero_trace_attention.1} parent=1 // pred_check
      _
    $region47: #{diffeq_zero_trace_attention.1} parent=1 // pred_check_branch
      %47 = sbr.rel (0) target = $region49
    $region48: #{diffeq_zero_trace_attention.1} parent=1 // pred_region
      _
    $region49: #{diffeq_zero_trace_attention.1} parent=1 // pred_fallthru
      _
    // Predicated region
    $region50: #{diffeq_zero_trace_attention.1} parent=1 // pred_check
      _
    $region51: #{diffeq_zero_trace_attention.1} parent=1 // pred_check_branch
      %49 = sbr.rel (0) target = $region53
    $region52: #{diffeq_zero_trace_attention.1} parent=1 // pred_region
      _
    $region53: #{diffeq_zero_trace_attention.1} parent=1 // pred_fallthru
      _
    // Predicated region
    $region54: #{diffeq_zero_trace_attention.1} parent=1 // pred_check
      _
    $region55: #{diffeq_zero_trace_attention.1} parent=1 // pred_check_branch
      %51 = sbr.rel (0) target = $region57
    $region56: #{diffeq_zero_trace_attention.1} parent=1 // pred_region
      _
    $region57: #{diffeq_zero_trace_attention.1} parent=1 // pred_fallthru
      _
    // Predicated region
    $region58: #{diffeq_zero_trace_attention.1} parent=1 // pred_check
      _
    $region59: #{diffeq_zero_trace_attention.1} parent=1 // pred_check_branch
      %53 = sbr.rel (0) target = $region61
    $region60: #{diffeq_zero_trace_attention.1} parent=1 // pred_region
      _
    $region61: #{diffeq_zero_trace_attention.1} parent=1 // pred_fallthru
      _
    // Predicated region
    $region62: #{diffeq_zero_trace_attention.1} parent=1 // pred_check
      _
    $region63: #{diffeq_zero_trace_attention.1} parent=1 // pred_check_branch
      %55 = sbr.rel (0) target = $region65
    $region64: #{diffeq_zero_trace_attention.1} parent=1 // pred_region
      _
    $region65: #{diffeq_zero_trace_attention.1} parent=1 // pred_fallthru
      _
    // Predicated region
    $region66: #{diffeq_zero_trace_attention.1} parent=1 // pred_check
      _
    $region67: #{diffeq_zero_trace_attention.1} parent=1 // pred_check_branch
      %57 = sbr.rel (0) target = $region69
    $region68: #{diffeq_zero_trace_attention.1} parent=1 // pred_region
      _
    $region69: #{diffeq_zero_trace_attention.1} parent=1 // pred_fallthru
      _
    // Predicated region
    $region70: #{diffeq_zero_trace_attention.1} parent=1 // pred_check
      _
    $region71: #{diffeq_zero_trace_attention.1} parent=1 // pred_check_branch
      %59 = sbr.rel (0) target = $region73
    $region72: #{diffeq_zero_trace_attention.1} parent=1 // pred_region
      _
    $region73: #{diffeq_zero_trace_attention.1} parent=1 // pred_fallthru
      _
    %v61 = vld [vmem:[%s0] sm:$0xff]
    %v62 = vld [vmem:[%s0 + $0x8] sm:$0xff]
    %v63 = vpack.c.bf16 %v62, %v61
    %v64 = vld [vmem:[%s2] sm:$0x3]
    %v65 = vld [vmem:[%s3] sm:$0x1]
    %v67 = vlaneseq
    %v68 = vshrl.u32 %v67, 7
    %v69 = vsub.s32 0, %v68
    %v70 = vrot.slane %v65, %v69
    %vm72 = vcmask 31744
    %v74 = vsel %vm72, %v63, 0
    %vm76 = vcmask 1041408
    %v78 = vsel %vm76, %v64, 0
    %80 = vmatprep.subr.bf16.mxu0 0
    %81 = vmatpush1.bf16.msra.mxu0 %v78
    %82 = vmatprep.subr.bf16.mxu0 0
    %83 = vmatpush1.bf16.msra.mxu0 0
    %84 = vmatprep.subr.bf16.mxu0 0
    %85 = vmatpush1.bf16.msra.mxu0 0
    %86 = vmatprep.subr.bf16.mxu0 0
    %87 = vmatpush1.bf16.msra.mxu0 0
    %88 = vmatprep.subr.bf16.mxu0 0
    %89 = vmatpush1.bf16.msra.mxu0 0
    %90 = vmatprep.subr.bf16.mxu0 0
    %91 = vmatpush1.bf16.msra.mxu0 0
    %92 = vmatprep.subr.bf16.mxu0 0
    %93 = vmatpush1.bf16.msra.mxu0 0
    %94 = vmatprep.subr.bf16.mxu0 0
    %95 = vmatpush1.bf16.msra.mxu0 0
    %96 = vmatprep.subr.bf16.mxu0 0
    %97 = vmatpush1.bf16.msra.mxu0 0
    %98 = vmatprep.subr.bf16.mxu0 0
    %99 = vmatpush1.bf16.msra.mxu0 0
    %100 = vmatprep.subr.bf16.mxu0 0
    %101 = vmatpush1.bf16.msra.mxu0 0
    %102 = vmatprep.subr.bf16.mxu0 0
    %103 = vmatpush1.bf16.msra.mxu0 0
    %104 = vmatprep.subr.bf16.mxu0 0
    %105 = vmatpush1.bf16.msra.mxu0 0
    %106 = vmatprep.subr.bf16.mxu0 0
    %107 = vmatpush1.bf16.msra.mxu0 0
    %108 = vmatprep.subr.bf16.mxu0 0
    %109 = vmatpush1.bf16.msra.mxu0 0
    %110 = vmatprep.subr.bf16.mxu0 0
    %111 = vmatpush1.bf16.msra.mxu0 0
    %112 = vmatprep.mubr.bf16.mxu0 0
    %113 = vmatmul.mubr.bf16.gmra.mrb[0].mxu0 %v74
    %v114 = vpop.f32.mrb[0].mxu0
    %v115 = vadd.f32 %v70, %v114
    %v116 = vpop.f32.mrb[0].mxu0
    %v117 = vpop.f32.mrb[0].mxu0
    %v118 = vadd.f32 %v70, %v117
    %v119 = vpop.f32.mrb[0].mxu0
    %120 = vdwg.mxu0
    %v121 = vmax.f32 %v115, 0.0
    %v122 = vmax.f32 %v118, 0.0
    %v123 = vpack.c.bf16 %v122, %v121
    %v124 = vtanh.pop %v115
    %v125 = vtanh.pop %v118
    %v126 = vpack.c.bf16 %v125, %v124
    %v127 = vld [vmem:[%s4] sm:$0xf]
    %v128 = vld [vmem:[%s4 + $0x4] sm:$0xf]
    %v129 = vld [vmem:[%s4 + $0x8] sm:$0xf]
    %v130 = vld [vmem:[%s4 + $0xc] sm:$0xf]
    %v131 = vld [vmem:[%s5] sm:$0x1]
    %v133 = vlaneseq
    %v134 = vshrl.u32 %v133, 7
    %v135 = vsub.s32 0, %v134
    %v136 = vrot.slane %v131, %v135
    %v142 = vunpack.c.l.b16 %v127
    %v143 = vunpack.c.l.b16 %v128
    %v144 = vunpack.c.l.b16 %v129
    %v145 = vunpack.c.l.b16 %v130
    %v146 = vpack.c.b16 %v143, %v142
    %v147 = vpack.c.b16 %v145, %v144
    %vm150 = vcmask 261120
    %v152 = vsel %vm150, %v123, 0
    %154 = vmatprep.subr.bf16.mxu0 0
    %155 = vmatpush1.bf16.msra.mxu0 %v146
    %156 = vmatprep.subr.bf16.mxu0 0
    %157 = vmatpush1.bf16.msra.mxu0 %v147
    %158 = vmatprep.subr.bf16.mxu0 0
    %159 = vmatpush1.bf16.msra.mxu0 0
    %160 = vmatprep.subr.bf16.mxu0 0
    %161 = vmatpush1.bf16.msra.mxu0 0
    %162 = vmatprep.subr.bf16.mxu0 0
    %163 = vmatpush1.bf16.msra.mxu0 0
    %164 = vmatprep.subr.bf16.mxu0 0
    %165 = vmatpush1.bf16.msra.mxu0 0
    %166 = vmatprep.subr.bf16.mxu0 0
    %167 = vmatpush1.bf16.msra.mxu0 0
    %168 = vmatprep.subr.bf16.mxu0 0
    %169 = vmatpush1.bf16.msra.mxu0 0
    %170 = vmatprep.subr.bf16.mxu0 0
    %171 = vmatpush1.bf16.msra.mxu0 0
    %172 = vmatprep.subr.bf16.mxu0 0
    %173 = vmatpush1.bf16.msra.mxu0 0
    %174 = vmatprep.subr.bf16.mxu0 0
    %175 = vmatpush1.bf16.msra.mxu0 0
    %176 = vmatprep.subr.bf16.mxu0 0
    %177 = vmatpush1.bf16.msra.mxu0 0
    %178 = vmatprep.subr.bf16.mxu0 0
    %179 = vmatpush1.bf16.msra.mxu0 0
    %180 = vmatprep.subr.bf16.mxu0 0
    %181 = vmatpush1.bf16.msra.mxu0 0
    %182 = vmatprep.subr.bf16.mxu0 0
    %183 = vmatpush1.bf16.msra.mxu0 0
    %184 = vmatprep.subr.bf16.mxu0 0
    %185 = vmatpush1.bf16.msra.mxu0 0
    %186 = vmatprep.mubr.bf16.mxu0 0
    %187 = vmatmul.mubr.bf16.gmra.mrb[0].mxu0 %v152
    %v188 = vpop.f32.mrb[0].mxu0
    %v189 = vadd.f32 %v136, %v188
    %v190 = vpop.f32.mrb[0].mxu0
    %v191 = vpop.f32.mrb[0].mxu0
    %v192 = vadd.f32 %v136, %v191
    %v193 = vpop.f32.mrb[0].mxu0
    %194 = vdwg.mxu0
    %v195 = vpack.c.bf16 %v192, %v189
    %v196 = vld [vmem:[%s6] sm:$0xf]
    %v197 = vld [vmem:[%s6 + $0x4] sm:$0xf]
    %v198 = vld [vmem:[%s6 + $0x8] sm:$0xf]
    %v199 = vld [vmem:[%s6 + $0xc] sm:$0xf]
    %v200 = vld [vmem:[%s7] sm:$0x1]
    %v202 = vlaneseq
    %v203 = vshrl.u32 %v202, 7
    %v204 = vsub.s32 0, %v203
    %v205 = vrot.slane %v200, %v204
    %208 = vrot.lane.b32.xlu0 %v126, 96
    %v209 = vpop.permute.xlu0 %208
    %v214 = vunpack.c.l.b16 %v196
    %v215 = vunpack.c.l.b16 %v197
    %v216 = vunpack.c.l.b16 %v198
    %v217 = vunpack.c.l.b16 %v199
    %v218 = vpack.c.b16 %v215, %v214
    %v219 = vpack.c.b16 %v217, %v216
    %v223 = vsel %vm150, %v209, 0
    %225 = vmatprep.subr.bf16.mxu0 0
    %226 = vmatpush1.bf16.msra.mxu0 %v218
    %227 = vmatprep.subr.bf16.mxu0 0
    %228 = vmatpush1.bf16.msra.mxu0 %v219
    %229 = vmatprep.subr.bf16.mxu0 0
    %230 = vmatpush1.bf16.msra.mxu0 0
    %231 = vmatprep.subr.bf16.mxu0 0
    %232 = vmatpush1.bf16.msra.mxu0 0
    %233 = vmatprep.subr.bf16.mxu0 0
    %234 = vmatpush1.bf16.msra.mxu0 0
    %235 = vmatprep.subr.bf16.mxu0 0
    %236 = vmatpush1.bf16.msra.mxu0 0
    %237 = vmatprep.subr.bf16.mxu0 0
    %238 = vmatpush1.bf16.msra.mxu0 0
    %239 = vmatprep.subr.bf16.mxu0 0
    %240 = vmatpush1.bf16.msra.mxu0 0
    %241 = vmatprep.subr.bf16.mxu0 0
    %242 = vmatpush1.bf16.msra.mxu0 0
    %243 = vmatprep.subr.bf16.mxu0 0
    %244 = vmatpush1.bf16.msra.mxu0 0
    %245 = vmatprep.subr.bf16.mxu0 0
    %246 = vmatpush1.bf16.msra.mxu0 0
    %247 = vmatprep.subr.bf16.mxu0 0
    %248 = vmatpush1.bf16.msra.mxu0 0
    %249 = vmatprep.subr.bf16.mxu0 0
    %250 = vmatpush1.bf16.msra.mxu0 0
    %251 = vmatprep.subr.bf16.mxu0 0
    %252 = vmatpush1.bf16.msra.mxu0 0
    %253 = vmatprep.subr.bf16.mxu0 0
    %254 = vmatpush1.bf16.msra.mxu0 0
    %255 = vmatprep.subr.bf16.mxu0 0
    %256 = vmatpush1.bf16.msra.mxu0 0
    %257 = vmatprep.mubr.bf16.mxu0 0
    %258 = vmatmul.mubr.bf16.gmra.mrb[0].mxu0 %v223
    %v259 = vpop.f32.mrb[0].mxu0
    %v260 = vadd.f32 %v205, %v259
    %v261 = vpop.f32.mrb[0].mxu0
    %v262 = vpop.f32.mrb[0].mxu0
    %v263 = vadd.f32 %v205, %v262
    %v264 = vpop.f32.mrb[0].mxu0
    %265 = vdwg.mxu0
    %v266 = vld [vmem:[%s1] sm:$0xf]
    %v267 = vpack.c.bf16 %v266, %v266
    %v268 = vld [vmem:[%s8] sm:$0xf]
    %v269 = vld [vmem:[%s8 + $0x4] sm:$0xf]
    %v270 = vld [vmem:[%s8 + $0x8] sm:$0xf]
    %v271 = vld [vmem:[%s8 + $0xc] sm:$0xf]
    %v272 = vld [vmem:[%s9] sm:$0xff]
    %v273 = vld [vmem:[%s9 + $0x8] sm:$0xff]
    %v274 = vld [vmem:[%s9 + $0x10] sm:$0xff]
    %v275 = vld [vmem:[%s9 + $0x18] sm:$0xff]
    %277 = vset.pattern.permute.xlu0 0
    %278 = vperm.xlu0 %277, %v272
    %v279 = vpop.permute.xlu0 %278
    %282 = vset.pattern.permute.xlu0 0
    %283 = vperm.xlu0 %282, %v273
    %v284 = vpop.permute.xlu0 %283
    %287 = vset.pattern.permute.xlu0 0
    %288 = vperm.xlu0 %287, %v274
    %v289 = vpop.permute.xlu0 %288
    %292 = vset.pattern.permute.xlu0 0
    %293 = vperm.xlu0 %292, %v275
    %v294 = vpop.permute.xlu0 %293
    %v300 = vunpack.c.l.b16 %v268
    %v301 = vunpack.c.l.b16 %v269
    %v302 = vunpack.c.l.b16 %v270
    %v303 = vunpack.c.l.b16 %v271
    %v304 = vpack.c.b16 %v301, %v300
    %v305 = vpack.c.b16 %v303, %v302
    %v307 = vsel %vm72, %v304, 0
    %v310 = vsel %vm72, %v305, 0
    %v313 = vsel %vm76, %v267, 0
    %315 = vmatprep.subr.bf16.mxu0 0
    %316 = vmatpush1.bf16.msra.mxu0 %v313
    %317 = vmatprep.subr.bf16.mxu0 0
    %318 = vmatpush1.bf16.msra.mxu0 0
    %319 = vmatprep.subr.bf16.mxu0 0
    %320 = vmatpush1.bf16.msra.mxu0 0
    %321 = vmatprep.subr.bf16.mxu0 0
    %322 = vmatpush1.bf16.msra.mxu0 0
    %323 = vmatprep.subr.bf16.mxu0 0
    %324 = vmatpush1.bf16.msra.mxu0 0
    %325 = vmatprep.subr.bf16.mxu0 0
    %326 = vmatpush1.bf16.msra.mxu0 0
    %327 = vmatprep.subr.bf16.mxu0 0
    %328 = vmatpush1.bf16.msra.mxu0 0
    %329 = vmatprep.subr.bf16.mxu0 0
    %330 = vmatpush1.bf16.msra.mxu0 0
    %331 = vmatprep.subr.bf16.mxu0 0
    %332 = vmatpush1.bf16.msra.mxu0 0
    %333 = vmatprep.subr.bf16.mxu0 0
    %334 = vmatpush1.bf16.msra.mxu0 0
    %335 = vmatprep.subr.bf16.mxu0 0
    %336 = vmatpush1.bf16.msra.mxu0 0
    %337 = vmatprep.subr.bf16.mxu0 0
    %338 = vmatpush1.bf16.msra.mxu0 0
    %339 = vmatprep.subr.bf16.mxu0 0
    %340 = vmatpush1.bf16.msra.mxu0 0
    %341 = vmatprep.subr.bf16.mxu0 0
    %342 = vmatpush1.bf16.msra.mxu0 0
    %343 = vmatprep.subr.bf16.mxu0 0
    %344 = vmatpush1.bf16.msra.mxu0 0
    %345 = vmatprep.subr.bf16.mxu0 0
    %346 = vmatpush1.bf16.msra.mxu0 0
    %347 = vmatprep.mubr.bf16.mxu0 0
    %348 = vmatmul.mubr.bf16.gmra.mrb[0].mxu0 %v307
    %v349 = vpop.f32.mrb[0].mxu0
    %v350 = vadd.f32 %v279, %v349
    %v351 = vpop.f32.mrb[0].mxu0
    %v352 = vpop.f32.mrb[0].mxu0
    %v353 = vadd.f32 %v284, %v352
    %v354 = vpop.f32.mrb[0].mxu0
    %355 = vmatprep.mubr.bf16.mxu0 0
    %356 = vmatmul.mubr.bf16.gmra.mrb[0].mxu0 %v310
    %v357 = vpop.f32.mrb[0].mxu0
    %v358 = vadd.f32 %v289, %v357
    %v359 = vpop.f32.mrb[0].mxu0
    %v360 = vpop.f32.mrb[0].mxu0
    %v361 = vadd.f32 %v294, %v360
    %v362 = vpop.f32.mrb[0].mxu0
    %363 = vdwg.mxu0
    %v364 = vtanh.pop %v350
    %v365 = vtanh.pop %v353
    %v366 = vtanh.pop %v358
    %v367 = vtanh.pop %v361
    %v368 = vpack.c.bf16 %v365, %v364
    %v369 = vpack.c.bf16 %v367, %v366
    %v370 = vld [vmem:[%s10] sm:$0xf]
    %v371 = vld [vmem:[%s10 + $0x4] sm:$0xf]
    %v372 = vld [vmem:[%s10 + $0x8] sm:$0xf]
    %v373 = vld [vmem:[%s10 + $0xc] sm:$0xf]
    %v374 = vld [vmem:[%s11] sm:$0xff]
    %v375 = vld [vmem:[%s11 + $0x8] sm:$0xff]
    %v376 = vld [vmem:[%s11 + $0x10] sm:$0xff]
    %v377 = vld [vmem:[%s11 + $0x18] sm:$0xff]
    %379 = vset.pattern.permute.xlu0 0
    %380 = vperm.xlu0 %379, %v374
    %v381 = vpop.permute.xlu0 %380
    %384 = vset.pattern.permute.xlu0 0
    %385 = vperm.xlu0 %384, %v375
    %v386 = vpop.permute.xlu0 %385
    %389 = vset.pattern.permute.xlu0 0
    %390 = vperm.xlu0 %389, %v376
    %v391 = vpop.permute.xlu0 %390
    %394 = vset.pattern.permute.xlu0 0
    %395 = vperm.xlu0 %394, %v377
    %v396 = vpop.permute.xlu0 %395
    %v402 = vunpack.c.l.b16 %v370
    %v403 = vunpack.c.l.b16 %v371
    %v404 = vunpack.c.l.b16 %v372
    %v405 = vunpack.c.l.b16 %v373
    %v406 = vpack.c.b16 %v403, %v402
    %v407 = vpack.c.b16 %v405, %v404
    %v409 = vsel %vm150, %v406, 0
    %v412 = vsel %vm150, %v407, 0
    %414 = vmatprep.subr.bf16.mxu0 0
    %415 = vmatpush1.bf16.msra.mxu0 %v368
    %416 = vmatprep.subr.bf16.mxu0 0
    %417 = vmatpush1.bf16.msra.mxu0 %v369
    %418 = vmatprep.subr.bf16.mxu0 0
    %419 = vmatpush1.bf16.msra.mxu0 0
    %420 = vmatprep.subr.bf16.mxu0 0
    %421 = vmatpush1.bf16.msra.mxu0 0
    %422 = vmatprep.subr.bf16.mxu0 0
    %423 = vmatpush1.bf16.msra.mxu0 0
    %424 = vmatprep.subr.bf16.mxu0 0
    %425 = vmatpush1.bf16.msra.mxu0 0
    %426 = vmatprep.subr.bf16.mxu0 0
    %427 = vmatpush1.bf16.msra.mxu0 0
    %428 = vmatprep.subr.bf16.mxu0 0
    %429 = vmatpush1.bf16.msra.mxu0 0
    %430 = vmatprep.subr.bf16.mxu0 0
    %431 = vmatpush1.bf16.msra.mxu0 0
    %432 = vmatprep.subr.bf16.mxu0 0
    %433 = vmatpush1.bf16.msra.mxu0 0
    %434 = vmatprep.subr.bf16.mxu0 0
    %435 = vmatpush1.bf16.msra.mxu0 0
    %436 = vmatprep.subr.bf16.mxu0 0
    %437 = vmatpush1.bf16.msra.mxu0 0
    %438 = vmatprep.subr.bf16.mxu0 0
    %439 = vmatpush1.bf16.msra.mxu0 0
    %440 = vmatprep.subr.bf16.mxu0 0
    %441 = vmatpush1.bf16.msra.mxu0 0
    %442 = vmatprep.subr.bf16.mxu0 0
    %443 = vmatpush1.bf16.msra.mxu0 0
    %444 = vmatprep.subr.bf16.mxu0 0
    %445 = vmatpush1.bf16.msra.mxu0 0
    %446 = vmatprep.mubr.bf16.mxu0 0
    %447 = vmatmul.mubr.bf16.gmra.mrb[0].mxu0 %v409
    %v448 = vpop.f32.mrb[0].mxu0
    %v449 = vadd.f32 %v381, %v448
    %v450 = vpop.f32.mrb[0].mxu0
    %v451 = vpop.f32.mrb[0].mxu0
    %v452 = vadd.f32 %v386, %v451
    %v453 = vpop.f32.mrb[0].mxu0
    %454 = vmatprep.mubr.bf16.mxu0 0
    %455 = vmatmul.mubr.bf16.gmra.mrb[0].mxu0 %v412
    %v456 = vpop.f32.mrb[0].mxu0
    %v457 = vadd.f32 %v391, %v456
    %v458 = vpop.f32.mrb[0].mxu0
    %v459 = vpop.f32.mrb[0].mxu0
    %v460 = vadd.f32 %v396, %v459
    %v461 = vpop.f32.mrb[0].mxu0
    %462 = vdwg.mxu0
    %v463 = vpack.c.bf16 %v452, %v449
    %v464 = vpack.c.bf16 %v460, %v457
    %v465 = vld [vmem:[%s12] sm:$0xf]
    %v466 = vld [vmem:[%s12 + $0x4] sm:$0xf]
    %v467 = vld [vmem:[%s12 + $0x8] sm:$0xf]
    %v468 = vld [vmem:[%s12 + $0xc] sm:$0xf]
    %v469 = vld [vmem:[%s12 + $0x10] sm:$0xf]
    %v470 = vld [vmem:[%s12 + $0x14] sm:$0xf]
    %v471 = vld [vmem:[%s12 + $0x18] sm:$0xf]
    %v472 = vld [vmem:[%s12 + $0x1c] sm:$0xf]
    %v473 = vld [vmem:[%s12 + $0x20] sm:$0xf]
    %v474 = vld [vmem:[%s12 + $0x24] sm:$0xf]
    %v475 = vld [vmem:[%s12 + $0x28] sm:$0xf]
    %v476 = vld [vmem:[%s12 + $0x2c] sm:$0xf]
    %v477 = vld [vmem:[%s12 + $0x30] sm:$0xf]
    %v478 = vld [vmem:[%s12 + $0x34] sm:$0xf]
    %v479 = vld [vmem:[%s12 + $0x38] sm:$0xf]
    %v480 = vld [vmem:[%s12 + $0x3c] sm:$0xf]
    %v497 = vunpack.c.l.b16 %v465
    %v498 = vunpack.c.l.b16 %v466
    %v499 = vunpack.c.l.b16 %v467
    %v500 = vunpack.c.l.b16 %v468
    %v501 = vunpack.c.l.b16 %v469
    %v502 = vunpack.c.l.b16 %v470
    %v503 = vunpack.c.l.b16 %v471
    %v504 = vunpack.c.l.b16 %v472
    %v505 = vunpack.c.l.b16 %v473
    %v506 = vunpack.c.l.b16 %v474
    %v507 = vunpack.c.l.b16 %v475
    %v508 = vunpack.c.l.b16 %v476
    %v509 = vunpack.c.l.b16 %v477
    %v510 = vunpack.c.l.b16 %v478
    %v511 = vunpack.c.l.b16 %v479
    %v512 = vunpack.c.l.b16 %v480
    %v513 = vpack.c.b16 %v498, %v497
    %v514 = vpack.c.b16 %v500, %v499
    %v515 = vpack.c.b16 %v502, %v501
    %v516 = vpack.c.b16 %v504, %v503
    %v517 = vpack.c.b16 %v506, %v505
    %v518 = vpack.c.b16 %v508, %v507
    %v519 = vpack.c.b16 %v510, %v509
    %v520 = vpack.c.b16 %v512, %v511
    %v529 = vmul.bf16 %v463, %v513
    %v530 = vmul.bf16 %v464, %v514
    %v531 = vmul.bf16 %v463, %v515
    %v532 = vmul.bf16 %v464, %v516
    %v533 = vmul.bf16 %v463, %v517
    %v534 = vmul.bf16 %v464, %v518
    %v535 = vmul.bf16 %v463, %v519
    %v536 = vmul.bf16 %v464, %v520
    %539 = vrot.lane.b32.xlu0 %v260, 126
    %v540 = vpop.permute.xlu0 %539
    %541 = vrot.lane.b32.xlu0 %v263, 126
    %v542 = vpop.permute.xlu0 %541
    %v545 = vpack.c.bf16 %v263, %v260
    %v546 = vpack.c.bf16 %v542, %v540
    %549 = vrot.lane.b32.xlu0 %v545, 2
    %v550 = vpop.permute.xlu0 %549
    %551 = vrot.lane.b32.xlu0 %v546, 2
    %v552 = vpop.permute.xlu0 %551
    %553 = vrot.lane.b32.xlu0 %v545, 4
    %v554 = vpop.permute.xlu0 %553
    %555 = vrot.lane.b32.xlu0 %v546, 4
    %v556 = vpop.permute.xlu0 %555
    %557 = vrot.lane.b32.xlu0 %v545, 6
    %v558 = vpop.permute.xlu0 %557
    %559 = vrot.lane.b32.xlu0 %v546, 6
    %v560 = vpop.permute.xlu0 %559
    %vm561 = vcmask 15360
    %v564 = vsel %vm561, %v545, %v550
    %v567 = vsel %vm561, %v546, %v552
    %v569 = vsel %vm72, %v564, %v554
    %v571 = vsel %vm72, %v567, %v556
    %vm572 = vcmask 48128
    %v574 = vsel %vm572, %v569, %v558
    %v577 = vsel %vm572, %v571, %v560
    %v579 = vld [vmem:[%s13] sm:$0xf]
    %v580 = vld [vmem:[%s13 + $0x4] sm:$0xf]
    %v581 = vld [vmem:[%s13 + $0x8] sm:$0xf]
    %v582 = vld [vmem:[%s13 + $0xc] sm:$0xf]
    %v583 = vld [vmem:[%s13 + $0x10] sm:$0xf]
    %v584 = vld [vmem:[%s13 + $0x14] sm:$0xf]
    %v585 = vld [vmem:[%s13 + $0x18] sm:$0xf]
    %v586 = vld [vmem:[%s13 + $0x1c] sm:$0xf]
    %v587 = vld [vmem:[%s13 + $0x20] sm:$0xf]
    %v588 = vld [vmem:[%s13 + $0x24] sm:$0xf]
    %v589 = vld [vmem:[%s13 + $0x28] sm:$0xf]
    %v590 = vld [vmem:[%s13 + $0x2c] sm:$0xf]
    %v591 = vld [vmem:[%s13 + $0x30] sm:$0xf]
    %v592 = vld [vmem:[%s13 + $0x34] sm:$0xf]
    %v593 = vld [vmem:[%s13 + $0x38] sm:$0xf]
    %v594 = vld [vmem:[%s13 + $0x3c] sm:$0xf]
    %v611 = vunpack.c.l.b16 %v579
    %v612 = vunpack.c.l.b16 %v580
    %v613 = vunpack.c.l.b16 %v581
    %v614 = vunpack.c.l.b16 %v582
    %v615 = vunpack.c.l.b16 %v583
    %v616 = vunpack.c.l.b16 %v584
    %v617 = vunpack.c.l.b16 %v585
    %v618 = vunpack.c.l.b16 %v586
    %v619 = vunpack.c.l.b16 %v587
    %v620 = vunpack.c.l.b16 %v588
    %v621 = vunpack.c.l.b16 %v589
    %v622 = vunpack.c.l.b16 %v590
    %v623 = vunpack.c.l.b16 %v591
    %v624 = vunpack.c.l.b16 %v592
    %v625 = vunpack.c.l.b16 %v593
    %v626 = vunpack.c.l.b16 %v594
    %v627 = vpack.c.b16 %v612, %v611
    %v628 = vpack.c.b16 %v614, %v613
    %v629 = vpack.c.b16 %v616, %v615
    %v630 = vpack.c.b16 %v618, %v617
    %v631 = vpack.c.b16 %v620, %v619
    %v632 = vpack.c.b16 %v622, %v621
    %v633 = vpack.c.b16 %v624, %v623
    %v634 = vpack.c.b16 %v626, %v625
    %v643 = vmul.bf16 %v574, %v627
    %v644 = vmul.bf16 %v577, %v628
    %v645 = vmul.bf16 %v574, %v629
    %v646 = vmul.bf16 %v577, %v630
    %v647 = vmul.bf16 %v574, %v631
    %v648 = vmul.bf16 %v577, %v632
    %v649 = vmul.bf16 %v574, %v633
    %v650 = vmul.bf16 %v577, %v634
    %v651 = vld [vmem:[%s14] sm:$0xff]
    %v652 = vld [vmem:[%s14 + $0x8] sm:$0xff]
    %653 = vmatprep.subr.bf16.mxu0 0
    %654 = vmatpush1.bf16.msra.mxu0 %v529
    %655 = vmatprep.subr.bf16.mxu0 0
    %656 = vmatpush1.bf16.msra.mxu0 %v530
    %657 = vmatprep.subr.bf16.mxu0 0
    %658 = vmatpush1.bf16.msra.mxu0 %v531
    %659 = vmatprep.subr.bf16.mxu0 0
    %660 = vmatpush1.bf16.msra.mxu0 %v532
    %661 = vmatprep.subr.bf16.mxu0 0
    %662 = vmatpush1.bf16.msra.mxu0 %v533
    %663 = vmatprep.subr.bf16.mxu0 0
    %664 = vmatpush1.bf16.msra.mxu0 %v534
    %665 = vmatprep.subr.bf16.mxu0 0
    %666 = vmatpush1.bf16.msra.mxu0 %v535
    %667 = vmatprep.subr.bf16.mxu0 0
    %668 = vmatpush1.bf16.msra.mxu0 %v536
    %669 = vmatprep.subr.bf16.mxu0 0
    %670 = vmatpush1.bf16.msra.mxu0 0
    %671 = vmatprep.subr.bf16.mxu0 0
    %672 = vmatpush1.bf16.msra.mxu0 0
    %673 = vmatprep.subr.bf16.mxu0 0
    %674 = vmatpush1.bf16.msra.mxu0 0
    %675 = vmatprep.subr.bf16.mxu0 0
    %676 = vmatpush1.bf16.msra.mxu0 0
    %677 = vmatprep.subr.bf16.mxu0 0
    %678 = vmatpush1.bf16.msra.mxu0 0
    %679 = vmatprep.subr.bf16.mxu0 0
    %680 = vmatpush1.bf16.msra.mxu0 0
    %681 = vmatprep.subr.bf16.mxu0 0
    %682 = vmatpush1.bf16.msra.mxu0 0
    %683 = vmatprep.subr.bf16.mxu0 0
    %684 = vmatpush1.bf16.msra.mxu0 0
    %685 = vmatprep.mubr.bf16.mxu0 0
    %686 = vmatmul.mubr.bf16.gmra.mrb[0].mxu0 %v195
    %v687 = vpop.f32.mrb[0].mxu0
    %v688 = vadd.f32 %v651, %v687
    %v689 = vpop.f32.mrb[0].mxu0
    %v690 = vpop.f32.mrb[0].mxu0
    %v691 = vadd.f32 %v652, %v690
    %v692 = vpop.f32.mrb[0].mxu0
    %693 = vdwg.mxu0
    %694 = vmax.xlane.f32.xlu0 %v688
    %v695 = vpop.xlane.xlu0 %694
    %696 = vmax.xlane.f32.xlu0 %v691
    %v697 = vpop.xlane.xlu0 %696
    %v698 = vsub.f32 %v688, %v695
    %v699 = vsub.f32 %v691, %v697
    %v700 = vmul.f32 %v698, 1.442695
    %v701 = vpow.pop %v700
    %v702 = vmul.f32 %v699, 1.442695
    %v703 = vpow.pop %v702
    %v704 = vpack.c.bf16 %v703, %v701
    %v705 = vld [vmem:[%s15] sm:$0xf]
    %v706 = vld [vmem:[%s15 + $0x4] sm:$0xf]
    %v707 = vld [vmem:[%s15 + $0x8] sm:$0xf]
    %v708 = vld [vmem:[%s15 + $0xc] sm:$0xf]
    %v709 = vld [vmem:[%s15 + $0x10] sm:$0xf]
    %v710 = vld [vmem:[%s15 + $0x14] sm:$0xf]
    %v711 = vld [vmem:[%s15 + $0x18] sm:$0xf]
    %v712 = vld [vmem:[%s15 + $0x1c] sm:$0xf]
    %v713 = vld [vmem:[%s15 + $0x20] sm:$0xf]
    %v714 = vld [vmem:[%s15 + $0x24] sm:$0xf]
    %v715 = vld [vmem:[%s15 + $0x28] sm:$0xf]
    %v716 = vld [vmem:[%s15 + $0x2c] sm:$0xf]
    %v717 = vld [vmem:[%s15 + $0x30] sm:$0xf]
    %v718 = vld [vmem:[%s15 + $0x34] sm:$0xf]
    %v719 = vld [vmem:[%s15 + $0x38] sm:$0xf]
    %v720 = vld [vmem:[%s15 + $0x3c] sm:$0xf]
    %v737 = vunpack.c.l.b16 %v705
    %v738 = vunpack.c.l.b16 %v706
    %v739 = vunpack.c.l.b16 %v707
    %v740 = vunpack.c.l.b16 %v708
    %v741 = vunpack.c.l.b16 %v709
    %v742 = vunpack.c.l.b16 %v710
    %v743 = vunpack.c.l.b16 %v711
    %v744 = vunpack.c.l.b16 %v712
    %v745 = vunpack.c.l.b16 %v713
    %v746 = vunpack.c.l.b16 %v714
    %v747 = vunpack.c.l.b16 %v715
    %v748 = vunpack.c.l.b16 %v716
    %v749 = vunpack.c.l.b16 %v717
    %v750 = vunpack.c.l.b16 %v718
    %v751 = vunpack.c.l.b16 %v719
    %v752 = vunpack.c.l.b16 %v720
    %v753 = vpack.c.b16 %v738, %v737
    %v754 = vpack.c.b16 %v740, %v739
    %v755 = vpack.c.b16 %v742, %v741
    %v756 = vpack.c.b16 %v744, %v743
    %v757 = vpack.c.b16 %v746, %v745
    %v758 = vpack.c.b16 %v748, %v747
    %v759 = vpack.c.b16 %v750, %v749
    %v760 = vpack.c.b16 %v752, %v751
    %769 = vmatprep.subr.bf16.mxu0 0
    %770 = vmatpush1.bf16.msra.mxu0 %v753
    %771 = vmatprep.subr.bf16.mxu0 0
    %772 = vmatpush1.bf16.msra.mxu0 %v754
    %773 = vmatprep.subr.bf16.mxu0 0
    %774 = vmatpush1.bf16.msra.mxu0 %v755
    %775 = vmatprep.subr.bf16.mxu0 0
    %776 = vmatpush1.bf16.msra.mxu0 %v756
    %777 = vmatprep.subr.bf16.mxu0 0
    %778 = vmatpush1.bf16.msra.mxu0 %v757
    %779 = vmatprep.subr.bf16.mxu0 0
    %780 = vmatpush1.bf16.msra.mxu0 %v758
    %781 = vmatprep.subr.bf16.mxu0 0
    %782 = vmatpush1.bf16.msra.mxu0 %v759
    %783 = vmatprep.subr.bf16.mxu0 0
    %784 = vmatpush1.bf16.msra.mxu0 %v760
    %785 = vmatprep.subr.bf16.mxu0 0
    %786 = vmatpush1.bf16.msra.mxu0 0
    %787 = vmatprep.subr.bf16.mxu0 0
    %788 = vmatpush1.bf16.msra.mxu0 0
    %789 = vmatprep.subr.bf16.mxu0 0
    %790 = vmatpush1.bf16.msra.mxu0 0
    %791 = vmatprep.subr.bf16.mxu0 0
    %792 = vmatpush1.bf16.msra.mxu0 0
    %793 = vmatprep.subr.bf16.mxu0 0
    %794 = vmatpush1.bf16.msra.mxu0 0
    %795 = vmatprep.subr.bf16.mxu0 0
    %796 = vmatpush1.bf16.msra.mxu0 0
    %797 = vmatprep.subr.bf16.mxu0 0
    %798 = vmatpush1.bf16.msra.mxu0 0
    %799 = vmatprep.subr.bf16.mxu0 0
    %800 = vmatpush1.bf16.msra.mxu0 0
    %801 = vmatprep.mubr.bf16.mxu0 0
    %802 = vmatmul.mubr.bf16.gmra.mrb[0].mxu0 %v704
    %v803 = vpop.f32.mrb[0].mxu0
    %v804 = vadd.f32 0.0, %v803
    %v805 = vpop.f32.mrb[0].mxu0
    %v806 = vpop.f32.mrb[0].mxu0
    %v807 = vadd.f32 0.0, %v806
    %v808 = vpop.f32.mrb[0].mxu0
    %809 = vdwg.mxu0
    %v810 = vrcp.pop %v804
    %v811 = vrcp.pop %v807
    %v812 = vpack.c.bf16 %v811, %v810
    %v813 = vld [vmem:[%s16] sm:$0xf]
    %vm814 = vcmask 64512
    %v816 = vsel %vm814, %v812, 0
    %vm818 = vcmask 1043456
    %v820 = vsel %vm818, %v813, 0
    %822 = vmatprep.subr.bf16.mxu0 0
    %823 = vmatpush1.bf16.msra.mxu0 %v820
    %824 = vmatprep.subr.bf16.mxu0 0
    %825 = vmatpush1.bf16.msra.mxu0 0
    %826 = vmatprep.subr.bf16.mxu0 0
    %827 = vmatpush1.bf16.msra.mxu0 0
    %828 = vmatprep.subr.bf16.mxu0 0
    %829 = vmatpush1.bf16.msra.mxu0 0
    %830 = vmatprep.subr.bf16.mxu0 0
    %831 = vmatpush1.bf16.msra.mxu0 0
    %832 = vmatprep.subr.bf16.mxu0 0
    %833 = vmatpush1.bf16.msra.mxu0 0
    %834 = vmatprep.subr.bf16.mxu0 0
    %835 = vmatpush1.bf16.msra.mxu0 0
    %836 = vmatprep.subr.bf16.mxu0 0
    %837 = vmatpush1.bf16.msra.mxu0 0
    %838 = vmatprep.subr.bf16.mxu0 0
    %839 = vmatpush1.bf16.msra.mxu0 0
    %840 = vmatprep.subr.bf16.mxu0 0
    %841 = vmatpush1.bf16.msra.mxu0 0
    %842 = vmatprep.subr.bf16.mxu0 0
    %843 = vmatpush1.bf16.msra.mxu0 0
    %844 = vmatprep.subr.bf16.mxu0 0
    %845 = vmatpush1.bf16.msra.mxu0 0
    %846 = vmatprep.subr.bf16.mxu0 0
    %847 = vmatpush1.bf16.msra.mxu0 0
    %848 = vmatprep.subr.bf16.mxu0 0
    %849 = vmatpush1.bf16.msra.mxu0 0
    %850 = vmatprep.subr.bf16.mxu0 0
    %851 = vmatpush1.bf16.msra.mxu0 0
    %852 = vmatprep.subr.bf16.mxu0 0
    %853 = vmatpush1.bf16.msra.mxu0 0
    %854 = vmatprep.mubr.bf16.mxu0 0
    %855 = vmatmul.mubr.bf16.gmra.mrb[0].mxu0 %v816
    %v856 = vpop.f32.mrb[0].mxu0
    %v857 = vadd.f32 0.0, %v856
    %v858 = vpop.f32.mrb[0].mxu0
    %v859 = vpop.f32.mrb[0].mxu0
    %v860 = vadd.f32 0.0, %v859
    %v861 = vpop.f32.mrb[0].mxu0
    %862 = vdwg.mxu0
    %v863 = vmul.f32 %v701, %v857
    %v864 = vmul.f32 %v703, %v860
    %v865 = vpack.c.bf16 %v864, %v863
    %v866 = vld [vmem:[%s17] sm:$0x1]
    %v868 = vlaneseq
    %v869 = vshrl.u32 %v868, 7
    %v870 = vsub.s32 0, %v869
    %v871 = vrot.slane %v866, %v870
    %873 = vmatprep.subr.bf16.mxu0 0
    %874 = vmatpush1.bf16.msra.mxu0 %v643
    %875 = vmatprep.subr.bf16.mxu0 0
    %876 = vmatpush1.bf16.msra.mxu0 %v644
    %877 = vmatprep.subr.bf16.mxu0 0
    %878 = vmatpush1.bf16.msra.mxu0 %v645
    %879 = vmatprep.subr.bf16.mxu0 0
    %880 = vmatpush1.bf16.msra.mxu0 %v646
    %881 = vmatprep.subr.bf16.mxu0 0
    %882 = vmatpush1.bf16.msra.mxu0 %v647
    %883 = vmatprep.subr.bf16.mxu0 0
    %884 = vmatpush1.bf16.msra.mxu0 %v648
    %885 = vmatprep.subr.bf16.mxu0 0
    %886 = vmatpush1.bf16.msra.mxu0 %v649
    %887 = vmatprep.subr.bf16.mxu0 0
    %888 = vmatpush1.bf16.msra.mxu0 %v650
    %889 = vmatprep.subr.bf16.mxu0 0
    %890 = vmatpush1.bf16.msra.mxu0 0
    %891 = vmatprep.subr.bf16.mxu0 0
    %892 = vmatpush1.bf16.msra.mxu0 0
    %893 = vmatprep.subr.bf16.mxu0 0
    %894 = vmatpush1.bf16.msra.mxu0 0
    %895 = vmatprep.subr.bf16.mxu0 0
    %896 = vmatpush1.bf16.msra.mxu0 0
    %897 = vmatprep.subr.bf16.mxu0 0
    %898 = vmatpush1.bf16.msra.mxu0 0
    %899 = vmatprep.subr.bf16.mxu0 0
    %900 = vmatpush1.bf16.msra.mxu0 0
    %901 = vmatprep.subr.bf16.mxu0 0
    %902 = vmatpush1.bf16.msra.mxu0 0
    %903 = vmatprep.subr.bf16.mxu0 0
    %904 = vmatpush1.bf16.msra.mxu0 0
    %905 = vmatprep.mubr.bf16.mxu0 0
    %906 = vmatmul.mubr.bf16.gmra.mrb[0].mxu0 %v865
    %v907 = vpop.f32.mrb[0].mxu0
    %v908 = vadd.f32 %v871, %v907
    %v909 = vpop.f32.mrb[0].mxu0
    %v910 = vpop.f32.mrb[0].mxu0
    %v911 = vadd.f32 %v871, %v910
    %v912 = vpop.f32.mrb[0].mxu0
    %913 = vdwg.mxu0
    %914 = vst.msk [vmem:[#allocation2] sm:$0xff] %vm814, %v908
    %915 = vst.msk [vmem:[#allocation2 + $0x8] sm:$0xff] %vm814, %v911
    // Predicated region
    $region74: #{diffeq_zero_trace_attention.1} parent=1 // pred_check
      _
    $region75: #{diffeq_zero_trace_attention.1} parent=1 // pred_check_branch
      %917 = sbr.rel (0) target = $region77
    $region76: #{diffeq_zero_trace_attention.1} parent=1 // pred_region
      %s919 = ssub.s32 256, 256
      %920 = vsyncadd [#allocation3], %s919
      %s921 = sshll.u32 [#allocation2], 4
      %s922 = int_to_ptr.vmem [resolvable:$true] %s921
      %927 = dma.vmem_to_hbm [thread:$0]  %s922, 256, %s18, [#allocation3], 128, 128, 8
    $region77: #{diffeq_zero_trace_attention.1} parent=1 // pred_fallthru
      _
    // Predicated region
    $region78: #{diffeq_zero_trace_attention.1} parent=1 // pred_check
      _
    $region79: #{diffeq_zero_trace_attention.1} parent=1 // pred_check_branch
      %929 = sbr.rel (0) target = $region81
    $region80: #{diffeq_zero_trace_attention.1} parent=1 // pred_region
      %930 = dma.done [#allocation3], 256
    $region81: #{diffeq_zero_trace_attention.1} parent=1 // pred_fallthru
      _
    %931 = vsyncpa [#allocation3], 1

</llo_original>
